<compile_context>
chip_gen: v5e
topology: v5e:2x2
jax: 0.10.0
libtpu: 0.0.40
codegen_flags: <defaults>
</compile_context>

<pallas_src>
import functools
import math

import jax
import jax.numpy as jnp
from jax import lax
from jax.experimental import pallas as pl
from jax.experimental.pallas import tpu as pltpu


def _round_up(x, m):
    return ((x + m - 1) // m) * m


def _cdiv(a, b):
    return -(-a // b)


# ---------------------------------------------------------------------------
# Pass 1: Gram matrix G = X^T X (MXU) + per-sublane column-sum partials (VPU),
# accumulated in the resident output blocks.  Ragged last row-tile is masked
# in-kernel so no HBM pad copy is needed.
# ---------------------------------------------------------------------------
def _gram_stats_kernel(xg_ref, g_ref, s_ref, *, tile, mg, ragged):
    i = pl.program_id(0)

    @pl.when(i == 0)
    def _():
        g_ref[...] = jnp.zeros_like(g_ref)
        s_ref[...] = jnp.zeros_like(s_ref)

    x = xg_ref[...]                                     # (tile, gcin) f32
    if ragged:
        rows = lax.broadcasted_iota(jnp.int32, x.shape, 0)
        x = jnp.where(i * tile + rows < mg, x, 0.0)

    # G += x^T @ x on the MXU.
    g_ref[...] += lax.dot_general(
        x, x, (((0,), (0,)), ((), ())), preferred_element_type=jnp.float32)
    # Per-sublane partial column sums (pure VPU); the single cross-sublane
    # (XLU) reduction happens once, in the wrapper.
    s_ref[...] += jnp.sum(x.reshape(-1, 8, x.shape[-1]), axis=0)


# ---------------------------------------------------------------------------
# Pass 2: fused (Linear + BatchNorm) = one matmul + bias, lane-dense tiles.
# ---------------------------------------------------------------------------
def _folded_linear_kernel(xg_ref, w_ref, b_ref, o_ref):
    o_ref[...] = (jnp.dot(xg_ref[...], w_ref[...],
                          preferred_element_type=jnp.float32)
                  + b_ref[...]).astype(o_ref.dtype)


def batch_norm_knn(points, w, b, gamma, beta, *, eps=1e-5):
    """points: (B, N, K, Cin); w: (Cout, Cin); b/gamma/beta: (Cout,)."""
    B, N, K, Cin = points.shape
    Cout = w.shape[0]
    M = B * N * K
    f32 = jnp.float32

    if M == 0:
        return jnp.zeros((B, N, K, Cout), f32)

    x = points.reshape(M, Cin).astype(f32)
    w = w.astype(f32)
    b = b.astype(f32)
    gamma = gamma.astype(f32)
    beta = beta.astype(f32)

    # ---- Lane-dense grouping: pack `grp` consecutive points per row so every
    # tile is a multiple of 128 lanes.  Cin is zero-padded up to the next
    # divisor of 128 (or to a multiple of 128 if Cin > 128).
    if Cin <= 128:
        cin_p = 1 << max(0, (Cin - 1).bit_length())
    else:
        cin_p = _round_up(Cin, 128)
    grp = max(1, 128 // cin_p)
    gcin = grp * cin_p
    gcout = grp * Cout

    m_pad = _round_up(M, grp)
    mg = m_pad // grp

    # Pad copy only when unavoidable; the common KNN case (M % grp == 0,
    # Cin a divisor of 128) is pure free reshapes — no HBM staging traffic.
    if (cin_p != Cin) or (m_pad != M):
        x = jnp.pad(x, ((0, m_pad - M), (0, cin_p - Cin)))
    xg = x.reshape(mg, gcin)

    w_p = jnp.pad(w, ((0, 0), (0, cin_p - Cin))) if cin_p != Cin else w

    # ---- Tile sizes: per-pass ~24 MiB double-buffered VMEM budget (safe on
    # v7x's 64 MiB physical / 32 MiB scoped; plenty of headroom on v5e/v6e),
    # blocks large enough to amortize the ~0.35 us per-grid-step overhead.
    budget = 24 * (1 << 20)

    acc_bytes = 2 * 4 * (gcin * gcin + 8 * gcin)
    tile_p1 = (budget - acc_bytes) // (2 * 4 * gcin)
    tile_p1 = max(8, min(8192, (tile_p1 // 8) * 8, _round_up(mg, 8)))
    n_tiles_p1 = _cdiv(mg, tile_p1)
    ragged_p1 = (mg % tile_p1) != 0

    w_bytes = 2 * 4 * (gcin * gcout + gcout)
    tile_p2 = (budget - w_bytes) // (2 * 4 * (gcin + gcout))
    tile_p2 = max(8, min(4096, (tile_p2 // 8) * 8, _round_up(mg, 8)))
    n_tiles_p2 = _cdiv(mg, tile_p2)

    vmem_limit = 32 * (1 << 20)

    # ---- Pass 1: Gram + column sums (reads X once; no y round-trip). -------
    # TODO(synk): a CORE_PARALLEL 2-way split of this reduction could use both
    # v7x TensorCores; kept single-core pending bundle verification.  A
    # pl.Buffered(3) input pipeline is a further few-% option if DMA is still
    # exposed after the tile bump.
    g_out, s_out = pl.pallas_call(
        functools.partial(_gram_stats_kernel, tile=tile_p1, mg=mg,
                          ragged=ragged_p1),
        out_shape=(jax.ShapeDtypeStruct((gcin, gcin), f32),
                   jax.ShapeDtypeStruct((8, gcin), f32)),
        grid_spec=pltpu.PrefetchScalarGridSpec(
            num_scalar_prefetch=0,
            grid=(n_tiles_p1,),
            in_specs=[pl.BlockSpec((tile_p1, gcin), lambda i: (i, 0))],
            out_specs=[pl.BlockSpec((gcin, gcin), lambda i: (0, 0)),
                       pl.BlockSpec((8, gcin), lambda i: (0, 0))]),
        compiler_params=pltpu.CompilerParams(
            dimension_semantics=("arbitrary",),
            vmem_limit_bytes=vmem_limit),
        cost_estimate=pl.CostEstimate(
            flops=2 * mg * gcin * gcin,
            transcendentals=0,
            bytes_accessed=4 * (mg * gcin + gcin * gcin + 8 * gcin)),
    )(xg)

    # ---- Wrapper: exact batch stats of y = x @ W^T + b from (G, s) using the
    # centered form var = w Cov(x) w^T.  All arrays here are tiny.
    G = jnp.einsum('jajb->ab', g_out.reshape(grp, cin_p, grp, cin_p))
    s = s_out.sum(axis=0).reshape(grp, cin_p).sum(axis=0)

    inv_m = 1.0 / M
    xbar = s * inv_m                                      # (cin_p,)
    cov = G * inv_m - jnp.outer(xbar, xbar)               # (cin_p, cin_p)
    mean_y = w_p @ xbar + b                               # (Cout,)
    var_y = jnp.maximum(jnp.einsum('ci,ij,cj->c', w_p, cov, w_p), 0.0)
    scale = gamma * lax.rsqrt(var_y + eps)
    w_fold = w_p * scale[:, None]                         # (Cout, cin_p)
    b_fold = (b - mean_y) * scale + beta                  # (Cout,)

    # Block-diagonal grouped weight / tiled bias (lane-dense output tiles).
    w_big = jnp.kron(jnp.eye(grp, dtype=f32), w_fold.T)   # (gcin, gcout)
    b_big = jnp.tile(b_fold, grp).reshape(1, gcout)

    # ---- Pass 2: fused matmul + BN + store (reads X once, writes out once).
    out_g = pl.pallas_call(
        _folded_linear_kernel,
        out_shape=jax.ShapeDtypeStruct((mg, gcout), f32),
        grid_spec=pltpu.PrefetchScalarGridSpec(
            num_scalar_prefetch=0,
            grid=(n_tiles_p2,),
            in_specs=[pl.BlockSpec((tile_p2, gcin), lambda i: (i, 0)),
                      pl.BlockSpec((gcin, gcout), lambda i: (0, 0)),
                      pl.BlockSpec((1, gcout), lambda i: (0, 0))],
            out_specs=pl.BlockSpec((tile_p2, gcout), lambda i: (i, 0))),
        compiler_params=pltpu.CompilerParams(
            dimension_semantics=("parallel",),
            vmem_limit_bytes=vmem_limit),
        cost_estimate=pl.CostEstimate(
            flops=2 * mg * gcin * gcout,
            transcendentals=0,
            bytes_accessed=4 * (mg * (gcin + gcout) + gcin * gcout + gcout)),
    )(xg, w_big, b_big)

    out = out_g.reshape(m_pad, Cout)
    if m_pad != M:
        out = out[:M]
    return out.reshape(B, N, K, Cout)


def _reference(points, w, b, gamma, beta, eps=1e-5):
    y = jnp.einsum('bnkc,oc->bnko', points, w) + b
    mean = y.mean(axis=(0, 1, 2), keepdims=True)
    var = ((y - mean) ** 2).mean(axis=(0, 1, 2), keepdims=True)
    return (y - mean) * lax.rsqrt(var + eps) * gamma + beta


# TODO(synk): BatchNorm2d running_mean/running_var (momentum) buffer updates
# and eval-mode (use running stats) are training-time side effects that do not
# influence this forward output and are not modeled here.

if __name__ == "__main__":
    B, N, K = 2, 8, 4
    Cin, Cout = 16, 32

    key = jax.random.PRNGKey(0)
    k_pts, k_w, k_b, k_g, k_beta = jax.random.split(key, 5)

    points = jax.random.normal(k_pts, (B, N, K, Cin), dtype=jnp.float32)
    # nn.Linear-shaped params (deterministic synthetic init).
    w = jax.random.normal(k_w, (Cout, Cin), dtype=jnp.float32) * 0.1
    b = jax.random.normal(k_b, (Cout,), dtype=jnp.float32) * 0.1
    # nn.BatchNorm2d affine params (init weight=1, bias=0; perturbed slightly
    # so the affine path is exercised).
    gamma = jnp.ones((Cout,), jnp.float32) + 0.01 * jax.random.normal(k_g, (Cout,))
    beta = jnp.zeros((Cout,), jnp.float32) + 0.01 * jax.random.normal(k_beta, (Cout,))

    bn_fn = jax.jit(batch_norm_knn)
    out = bn_fn(points, w, b, gamma, beta)
    out = jax.block_until_ready(out)

    ref = _reference(points, w, b, gamma, beta)
    assert out.shape == (B, N, K, Cout)
    err = float(jnp.max(jnp.abs(out - ref)))
    assert err < 5e-4, f"max abs err {err}"

    print("KERNEL_OK")
</pallas_src>

<mosaic_0001>
module attributes {stable_mosaic.version = 11 : i64} {
  func.func @_gram_stats_kernel(%arg0: i32, %arg1: memref<8x128xf32, #tpu.memory_space<vmem>>, %arg2: memref<128x128xf32, #tpu.memory_space<vmem>>, %arg3: memref<8x128xf32, #tpu.memory_space<vmem>>) attributes {dimension_semantics = [#tpu.dimension_semantics<arbitrary>], iteration_bounds = array<i64: 1>, scalar_prefetch = 0 : i64, scratch_operands = 0 : i64, tpu.core_type = #tpu.core_type<tc>, window_params = [{transform_indices = @transform_0, window_bounds = array<i64: 8, 128>}, {pipeline_mode = #tpu.pipeline_mode<synchronous>, transform_indices = @transform_1, window_bounds = array<i64: 128, 128>}, {pipeline_mode = #tpu.pipeline_mode<synchronous>, transform_indices = @transform_2, window_bounds = array<i64: 8, 128>}]} {
    %c0_i32 = arith.constant 0 : i32
    %0 = arith.cmpi eq, %arg0, %c0_i32 : i32
    %1 = arith.extui %0 : i1 to i32
    %c0_i32_0 = arith.constant 0 : i32
    %2 = arith.cmpi ne, %1, %c0_i32_0 : i32
    scf.if %2 {
      %cst_11 = arith.constant 0.000000e+00 : f32
      %13 = vector.broadcast %cst_11 : f32 to vector<128x128xf32>
      %c0_12 = arith.constant 0 : index
      %c0_13 = arith.constant 0 : index
      %14 = vector.load %arg2[%c0_12, %c0_13] : memref<128x128xf32, #tpu.memory_space<vmem>>, vector<128x128xf32>
      tpu.vector_store %arg2[%c0_12, %c0_13], %13 {strides = array<i32>} : memref<128x128xf32, #tpu.memory_space<vmem>>, vector<128x128xf32>,
      %cst_14 = arith.constant 0.000000e+00 : f32
      %15 = vector.broadcast %cst_14 : f32 to vector<8x128xf32>
      %c0_15 = arith.constant 0 : index
      %c0_16 = arith.constant 0 : index
      %16 = vector.load %arg3[%c0_15, %c0_16] : memref<8x128xf32, #tpu.memory_space<vmem>>, vector<8x128xf32>
      tpu.vector_store %arg3[%c0_15, %c0_16], %15 {strides = array<i32>} : memref<8x128xf32, #tpu.memory_space<vmem>>, vector<8x128xf32>,
    } else {
    }
    %c0 = arith.constant 0 : index
    %c0_1 = arith.constant 0 : index
    %3 = vector.load %arg1[%c0, %c0_1] : memref<8x128xf32, #tpu.memory_space<vmem>>, vector<8x128xf32>
    %c0_2 = arith.constant 0 : index
    %c0_3 = arith.constant 0 : index
    %4 = vector.load %arg2[%c0_2, %c0_3] : memref<128x128xf32, #tpu.memory_space<vmem>>, vector<128x128xf32>
    %cst = arith.constant dense<0.000000e+00> : vector<128x128xf32>
    %5 = tpu.matmul %3, %3, %cst {dimension_numbers = #tpu.dot_dimension_numbers<[0], [0], [1], [1], [0, 1, 1, 1], [], []>} : vector<8x128xf32>, vector<8x128xf32>, vector<128x128xf32> -> vector<128x128xf32>
    %6 = arith.addf %4, %5 : vector<128x128xf32>
    %c0_4 = arith.constant 0 : index
    %c0_5 = arith.constant 0 : index
    %7 = vector.load %arg2[%c0_4, %c0_5] : memref<128x128xf32, #tpu.memory_space<vmem>>, vector<128x128xf32>
    tpu.vector_store %arg2[%c0_4, %c0_5], %6 {strides = array<i32>} : memref<128x128xf32, #tpu.memory_space<vmem>>, vector<128x128xf32>,
    %c0_6 = arith.constant 0 : index
    %c0_7 = arith.constant 0 : index
    %8 = vector.load %arg3[%c0_6, %c0_7] : memref<8x128xf32, #tpu.memory_space<vmem>>, vector<8x128xf32>
    %9 = vector.shape_cast %3 : vector<8x128xf32> to vector<1x8x128xf32>
    %cst_8 = arith.constant dense<0.000000e+00> : vector<8x128xf32>
    %10 = vector.multi_reduction <add>, %9, %cst_8 [0] : vector<1x8x128xf32> to vector<8x128xf32>
    %11 = arith.addf %8, %10 : vector<8x128xf32>
    %c0_9 = arith.constant 0 : index
    %c0_10 = arith.constant 0 : index
    %12 = vector.load %arg3[%c0_9, %c0_10] : memref<8x128xf32, #tpu.memory_space<vmem>>, vector<8x128xf32>
    tpu.vector_store %arg3[%c0_9, %c0_10], %11 {strides = array<i32>} : memref<8x128xf32, #tpu.memory_space<vmem>>, vector<8x128xf32>,
    return
  }
  func.func @transform_0(%arg0: i32) -> (i32, i32) {
    %c0_i32 = arith.constant 0 : i32
    %c0_i32_0 = arith.constant 0 : i32
    return %arg0, %c0_i32 : i32, i32
  }
  func.func @transform_1(%arg0: i32) -> (i32, i32) {
    %c0_i32 = arith.constant 0 : i32
    %c0_i32_0 = arith.constant 0 : i32
    %c0_i32_1 = arith.constant 0 : i32
    return %c0_i32, %c0_i32_0 : i32, i32
  }
  func.func @transform_2(%arg0: i32) -> (i32, i32) {
    %c0_i32 = arith.constant 0 : i32
    %c0_i32_0 = arith.constant 0 : i32
    %c0_i32_1 = arith.constant 0 : i32
    return %c0_i32, %c0_i32_0 : i32, i32
  }
}

module attributes {stable_mosaic.version = 11 : i64} {
  func.func @_folded_linear_kernel(%arg0: i32, %arg1: memref<8x128xf32, #tpu.memory_space<vmem>>, %arg2: memref<128x256xf32, #tpu.memory_space<vmem>>, %arg3: memref<1x256xf32, #tpu.memory_space<vmem>>, %arg4: memref<8x256xf32, #tpu.memory_space<vmem>>) attributes {dimension_semantics = [#tpu.dimension_semantics<parallel>], iteration_bounds = array<i64: 1>, scalar_prefetch = 0 : i64, scratch_operands = 0 : i64, tpu.core_type = #tpu.core_type<tc>, window_params = [{transform_indices = @transform_0, window_bounds = array<i64: 8, 128>}, {pipeline_mode = #tpu.pipeline_mode<synchronous>, transform_indices = @transform_1, window_bounds = array<i64: 128, 256>}, {pipeline_mode = #tpu.pipeline_mode<synchronous>, transform_indices = @transform_2, window_bounds = array<i64: 1, 256>}, {transform_indices = @transform_3, window_bounds = array<i64: 8, 256>}]} {
    %c0 = arith.constant 0 : index
    %c0_0 = arith.constant 0 : index
    %0 = vector.load %arg1[%c0, %c0_0] : memref<8x128xf32, #tpu.memory_space<vmem>>, vector<8x128xf32>
    %c0_1 = arith.constant 0 : index
    %c0_2 = arith.constant 0 : index
    %1 = vector.load %arg2[%c0_1, %c0_2] : memref<128x256xf32, #tpu.memory_space<vmem>>, vector<128x256xf32>
    %cst = arith.constant dense<0.000000e+00> : vector<8x256xf32>
    %2 = tpu.matmul %0, %1, %cst {dimension_numbers = #tpu.dot_dimension_numbers<[1], [0], [0], [1], [0, 0, 1, 1], [], []>} : vector<8x128xf32>, vector<128x256xf32>, vector<8x256xf32> -> vector<8x256xf32>
    %c0_3 = arith.constant 0 : index
    %c0_4 = arith.constant 0 : index
    %3 = vector.load %arg3[%c0_3, %c0_4] : memref<1x256xf32, #tpu.memory_space<vmem>>, vector<1x256xf32>
    %4 = vector.broadcast %3 : vector<1x256xf32> to vector<8x256xf32>
    %5 = arith.addf %2, %4 : vector<8x256xf32>
    %c0_5 = arith.constant 0 : index
    %c0_6 = arith.constant 0 : index
    %6 = vector.load %arg4[%c0_5, %c0_6] : memref<8x256xf32, #tpu.memory_space<vmem>>, vector<8x256xf32>
    tpu.vector_store %arg4[%c0_5, %c0_6], %5 {strides = array<i32>} : memref<8x256xf32, #tpu.memory_space<vmem>>, vector<8x256xf32>,
    return
  }
  func.func @transform_0(%arg0: i32) -> (i32, i32) {
    %c0_i32 = arith.constant 0 : i32
    %c0_i32_0 = arith.constant 0 : i32
    return %arg0, %c0_i32 : i32, i32
  }
  func.func @transform_1(%arg0: i32) -> (i32, i32) {
    %c0_i32 = arith.constant 0 : i32
    %c0_i32_0 = arith.constant 0 : i32
    %c0_i32_1 = arith.constant 0 : i32
    return %c0_i32, %c0_i32_0 : i32, i32
  }
  func.func @transform_2(%arg0: i32) -> (i32, i32) {
    %c0_i32 = arith.constant 0 : i32
    %c0_i32_0 = arith.constant 0 : i32
    %c0_i32_1 = arith.constant 0 : i32
    return %c0_i32, %c0_i32_0 : i32, i32
  }
  func.func @transform_3(%arg0: i32) -> (i32, i32) {
    %c0_i32 = arith.constant 0 : i32
    %c0_i32_0 = arith.constant 0 : i32
    return %arg0, %c0_i32 : i32, i32
  }
}

</mosaic_0001>

<llo_original>
// kernel: tile.8
$region0: #{tile.8}
  #allocation0 [shape = 's32[1]{0}', space=sflag, size = 0x4, scoped, tag = 'scoped memory for tile.8']
  %s0 = inlined_call_operand.vmem [shape: f32[32], index: 0, kind: input, shape index: {}]
  %s1 = inlined_call_operand.vmem [shape: f32[8,32], index: 1, kind: output, shape index: {}]
  // Predicated region
  $region2: #{tile.8} parent=0 // pred_check
    _
  $region3: #{tile.8} parent=0 // pred_check_branch
    %3 = sbr.rel (0) target = $region5
  $region4: #{tile.8} parent=0 // pred_region
    _
  $region5: #{tile.8} parent=0 // pred_fallthru
    _
  %v4 = vld [vmem:[%s0] ss:$0 sm:$0xff]
  %5 = vst [vmem:[%s1] sm:$0xff] %v4

// kernel: tile.9
$region0: #{tile.9}
  %s0 = inlined_call_operand.vmem [shape: f32[8,32], index: 0, kind: input, shape index: {}]
  %s1 = inlined_call_operand.vmem [shape: f32[1,256], index: 1, kind: output, shape index: {}]
  $region1: #{tile.9} parent=0
    #allocation0 [shape = 'u8[8192]{0}', space=vmem, size = 0x2000, scoped, tag = 'scoped mem for output reshape']
    %s2 = smov 3
    %v3 = vld [vmem:[%s0] ss:$4 sm:%s2]
    %vm4 = vcmask 261120
    %5 = vst.msk [vmem:[#allocation0] ss:$8 sm:$0x3] %vm4, %v3
    %s6 = scalar_lea.vmem %s0, 3
    %s7 = smov 3
    %v8 = vld [vmem:[%s6] ss:$4 sm:%s7]
    %9 = vrot.lane.b32.xlu0 %v8, 96
    %v10 = vpop.permute.xlu0 %9
    %vm11 = vcmask 1048320
    %12 = vst.msk [vmem:[#allocation0] ss:$8 sm:$0x3] %vm11, %v10
    %s13 = scalar_lea.vmem %s0, 2
    %s14 = smov 3
    %v15 = vld [vmem:[%s13] ss:$4 sm:%s14]
    %16 = vrot.lane.b32.xlu0 %v15, 64
    %v17 = vpop.permute.xlu0 %16
    %vm18 = vcmask 785920
    %19 = vst.msk [vmem:[#allocation0] ss:$8 sm:$0x3] %vm18, %v17
    %s20 = scalar_lea.vmem %s0, 1
    %s21 = smov 3
    %v22 = vld [vmem:[%s20] ss:$4 sm:%s21]
    %23 = vrot.lane.b32.xlu0 %v22, 32
    %v24 = vpop.permute.xlu0 %23
    %vm25 = vcmask 523520
    %26 = vst.msk [vmem:[#allocation0] ss:$8 sm:$0x3] %vm25, %v24
    %s28 = ssub.s32 2, 1
    %v29 = vld [vmem:[#allocation0] sm:%s28]
    %s31 = ssub.s32 2, 1
    %32 = vst [vmem:[%s1] sm:%s31] %v29
    %s33 = scalar_lea.vmem [#allocation0], 8
    %v34 = vld [vmem:[%s33] sm:%s28]
    %s36 = ssub.s32 2, 1
    %s37 = scalar_lea.vmem %s1, 1
    %38 = vst [vmem:[%s37] sm:%s36] %v34

// kernel: batch_norm_knn.2
$region0: #{batch_norm_knn.2}
  #allocation0 [shape = 'u32[]', space=smem, size = 0x4, offset = 0x4, fixed_abs, tag = 'smem constant byte address 0x4 - core index']
  #allocation1 [shape = 'u32[72,128]{1,0:T(1,128)}', space=vmem, size = 0x9000, scoped, tag = 'internal scratch']
  %s0 = inlined_call_operand.vmem [shape: f32[8,128], index: 0, kind: input, shape index: {}]
  %s1 = inlined_call_operand.vmem [shape: f32[128,128], index: 1, kind: output, shape index: {0}]
  %s2 = inlined_call_operand.vmem [shape: f32[8,128], index: 2, kind: output, shape index: {1}]
  %3 = xla_tuple %s1, %s2
  %s4 = sld [smem:[#allocation0]]
  $region26: #{batch_norm_knn.2} parent=0
    _
  %s6 = ssub.s32 1, %s4
  %s7 = scalar_select 0, %s6, %s4
  // Predicated region
  $region2: #{batch_norm_knn.2} parent=0 // pred_check
    _
  $region3: #{batch_norm_knn.2} parent=0 // pred_check_branch
    %9 = sbr.rel (0) target = $region5
  $region4: #{batch_norm_knn.2} parent=0 // pred_region
    _
  $region5: #{batch_norm_knn.2} parent=0 // pred_fallthru
    _
  %p10 = scmp.eq.s32.totalorder 0, 0
  // Predicated region
  $region6: #{batch_norm_knn.2} parent=0 // pred_check
    %p11 = pneg %p10
  $region7: #{batch_norm_knn.2} parent=0 // pred_check_branch
    %13 = sbr.rel (%p11) target = $region9
  $region8: #{batch_norm_knn.2} parent=0 // pred_region
    %14 = vst [vmem:[%s1] sm:$0xff] 0.0
    %15 = vst [vmem:[%s1 + $0x8] sm:$0xff] 0.0
    %16 = vst [vmem:[%s1 + $0x10] sm:$0xff] 0.0
    %17 = vst [vmem:[%s1 + $0x18] sm:$0xff] 0.0
    %18 = vst [vmem:[%s1 + $0x20] sm:$0xff] 0.0
    %19 = vst [vmem:[%s1 + $0x28] sm:$0xff] 0.0
    %20 = vst [vmem:[%s1 + $0x30] sm:$0xff] 0.0
    %21 = vst [vmem:[%s1 + $0x38] sm:$0xff] 0.0
    %22 = vst [vmem:[%s1 + $0x40] sm:$0xff] 0.0
    %23 = vst [vmem:[%s1 + $0x48] sm:$0xff] 0.0
    %24 = vst [vmem:[%s1 + $0x50] sm:$0xff] 0.0
    %25 = vst [vmem:[%s1 + $0x58] sm:$0xff] 0.0
    %26 = vst [vmem:[%s1 + $0x60] sm:$0xff] 0.0
    %27 = vst [vmem:[%s1 + $0x68] sm:$0xff] 0.0
    %28 = vst [vmem:[%s1 + $0x70] sm:$0xff] 0.0
    %29 = vst [vmem:[%s1 + $0x78] sm:$0xff] 0.0
    %30 = vst [vmem:[%s2] sm:$0xff] 0.0
  $region9: #{batch_norm_knn.2} parent=0 // pred_fallthru
    _
  %v31 = vld [vmem:[%s0] sm:$0xff]
  %v32 = vld [vmem:[%s1] sm:$0xff]
  %v33 = vld [vmem:[%s1 + $0x8] sm:$0xff]
  %v34 = vld [vmem:[%s1 + $0x10] sm:$0xff]
  %v35 = vld [vmem:[%s1 + $0x18] sm:$0xff]
  %v36 = vld [vmem:[%s1 + $0x20] sm:$0xff]
  %v37 = vld [vmem:[%s1 + $0x28] sm:$0xff]
  %v38 = vld [vmem:[%s1 + $0x30] sm:$0xff]
  %v39 = vld [vmem:[%s1 + $0x38] sm:$0xff]
  %v40 = vld [vmem:[%s1 + $0x40] sm:$0xff]
  %v41 = vld [vmem:[%s1 + $0x48] sm:$0xff]
  %v42 = vld [vmem:[%s1 + $0x50] sm:$0xff]
  %v43 = vld [vmem:[%s1 + $0x58] sm:$0xff]
  %v44 = vld [vmem:[%s1 + $0x60] sm:$0xff]
  %v45 = vld [vmem:[%s1 + $0x68] sm:$0xff]
  %v46 = vld [vmem:[%s1 + $0x70] sm:$0xff]
  %v47 = vld [vmem:[%s1 + $0x78] sm:$0xff]
  %48 = vxpose.xlu0.b32.start [1/16] %v31, 128
  %49 = vxpose.xlu0.b32.cont [2/16] 0.0, 128
  %50 = vxpose.xlu0.b32.cont [3/16] 0.0, 128
  %51 = vxpose.xlu0.b32.cont [4/16] 0.0, 128
  %52 = vxpose.xlu0.b32.cont [5/16] 0.0, 128
  %53 = vxpose.xlu0.b32.cont [6/16] 0.0, 128
  %54 = vxpose.xlu0.b32.cont [7/16] 0.0, 128
  %55 = vxpose.xlu0.b32.cont [8/16] 0.0, 128
  %56 = vxpose.xlu0.b32.cont [9/16] 0.0, 128
  %57 = vxpose.xlu0.b32.cont [10/16] 0.0, 128
  %58 = vxpose.xlu0.b32.cont [11/16] 0.0, 128
  %59 = vxpose.xlu0.b32.cont [12/16] 0.0, 128
  %60 = vxpose.xlu0.b32.cont [13/16] 0.0, 128
  %61 = vxpose.xlu0.b32.cont [14/16] 0.0, 128
  %62 = vxpose.xlu0.b32.cont [15/16] 0.0, 128
  %63 = vxpose.xlu0.b32.end [16/16] 0.0, 128
  %v64 = vpop.trf.xlu0
  %v65 = vpop.trf.xlu0
  %v66 = vpop.trf.xlu0
  %v67 = vpop.trf.xlu0
  %v68 = vpop.trf.xlu0
  %v69 = vpop.trf.xlu0
  %v70 = vpop.trf.xlu0
  %v71 = vpop.trf.xlu0
  %v72 = vpop.trf.xlu0
  %v73 = vpop.trf.xlu0
  %v74 = vpop.trf.xlu0
  %v75 = vpop.trf.xlu0
  %v76 = vpop.trf.xlu0
  %v77 = vpop.trf.xlu0
  %v78 = vpop.trf.xlu0
  %v79 = vpop.trf.xlu0
  %vm80 = vcmask 64512
  %v82 = vsel %vm80, %v64, 0
  %v85 = vsel %vm80, %v65, 0
  %v88 = vsel %vm80, %v66, 0
  %v91 = vsel %vm80, %v67, 0
  %v94 = vsel %vm80, %v68, 0
  %v97 = vsel %vm80, %v69, 0
  %v100 = vsel %vm80, %v70, 0
  %v103 = vsel %vm80, %v71, 0
  %v106 = vsel %vm80, %v72, 0
  %v109 = vsel %vm80, %v73, 0
  %v112 = vsel %vm80, %v74, 0
  %v115 = vsel %vm80, %v75, 0
  %v118 = vsel %vm80, %v76, 0
  %v121 = vsel %vm80, %v77, 0
  %v124 = vsel %vm80, %v78, 0
  %v127 = vsel %vm80, %v79, 0
  %129 = vmatpush.msra.mxu0 0.0
  %130 = vmatpush.msra.mxu0 0.0
  %131 = vmatpush.msra.mxu0 0.0
  %132 = vmatpush.msra.mxu0 0.0
  %133 = vmatpush.msra.mxu0 0.0
  %134 = vmatpush.msra.mxu0 0.0
  %135 = vmatpush.msra.mxu0 0.0
  %136 = vmatpush.msra.mxu0 0.0
  %137 = vmatpush.msra.mxu0 0.0
  %138 = vmatpush.msra.mxu0 0.0
  %139 = vmatpush.msra.mxu0 0.0
  %140 = vmatpush.msra.mxu0 0.0
  %141 = vmatpush.msra.mxu0 0.0
  %142 = vmatpush.msra.mxu0 0.0
  %143 = vmatpush.msra.mxu0 0.0
  %144 = vmatpush.msra.mxu0 %v31
  %145 = vmatmul.f32.gmra.mxu0 %v82
  %v146 = vpop.f32.mrf.mxu0
  %v147 = vadd.f32 0.0, %v146
  %148 = vmatmul.f32.gmra.mxu0 %v85
  %v149 = vpop.f32.mrf.mxu0
  %v150 = vadd.f32 0.0, %v149
  %151 = vmatmul.f32.gmra.mxu0 %v88
  %v152 = vpop.f32.mrf.mxu0
  %v153 = vadd.f32 0.0, %v152
  %154 = vmatmul.f32.gmra.mxu0 %v91
  %v155 = vpop.f32.mrf.mxu0
  %v156 = vadd.f32 0.0, %v155
  %157 = vmatmul.f32.gmra.mxu0 %v94
  %v158 = vpop.f32.mrf.mxu0
  %v159 = vadd.f32 0.0, %v158
  %160 = vmatmul.f32.gmra.mxu0 %v97
  %v161 = vpop.f32.mrf.mxu0
  %v162 = vadd.f32 0.0, %v161
  %163 = vmatmul.f32.gmra.mxu0 %v100
  %v164 = vpop.f32.mrf.mxu0
  %v165 = vadd.f32 0.0, %v164
  %166 = vmatmul.f32.gmra.mxu0 %v103
  %v167 = vpop.f32.mrf.mxu0
  %v168 = vadd.f32 0.0, %v167
  %169 = vmatmul.f32.gmra.mxu0 %v106
  %v170 = vpop.f32.mrf.mxu0
  %v171 = vadd.f32 0.0, %v170
  %172 = vmatmul.f32.gmra.mxu0 %v109
  %v173 = vpop.f32.mrf.mxu0
  %v174 = vadd.f32 0.0, %v173
  %175 = vmatmul.f32.gmra.mxu0 %v112
  %v176 = vpop.f32.mrf.mxu0
  %v177 = vadd.f32 0.0, %v176
  %178 = vmatmul.f32.gmra.mxu0 %v115
  %v179 = vpop.f32.mrf.mxu0
  %v180 = vadd.f32 0.0, %v179
  %181 = vmatmul.f32.gmra.mxu0 %v118
  %v182 = vpop.f32.mrf.mxu0
  %v183 = vadd.f32 0.0, %v182
  %184 = vmatmul.f32.gmra.mxu0 %v121
  %v185 = vpop.f32.mrf.mxu0
  %v186 = vadd.f32 0.0, %v185
  %187 = vmatmul.f32.gmra.mxu0 %v124
  %v188 = vpop.f32.mrf.mxu0
  %v189 = vadd.f32 0.0, %v188
  %190 = vmatmul.f32.gmra.mxu0 %v127
  %v191 = vpop.f32.mrf.mxu0
  %v192 = vadd.f32 0.0, %v191
  %193 = vdwg.mxu0
  %v194 = vadd.f32 %v32, %v147
  %v195 = vadd.f32 %v33, %v150
  %v196 = vadd.f32 %v34, %v153
  %v197 = vadd.f32 %v35, %v156
  %v198 = vadd.f32 %v36, %v159
  %v199 = vadd.f32 %v37, %v162
  %v200 = vadd.f32 %v38, %v165
  %v201 = vadd.f32 %v39, %v168
  %v202 = vadd.f32 %v40, %v171
  %v203 = vadd.f32 %v41, %v174
  %v204 = vadd.f32 %v42, %v177
  %v205 = vadd.f32 %v43, %v180
  %v206 = vadd.f32 %v44, %v183
  %v207 = vadd.f32 %v45, %v186
  %v208 = vadd.f32 %v46, %v189
  %v209 = vadd.f32 %v47, %v192
  %210 = vst [vmem:[%s1] sm:$0xff] %v194
  %211 = vst [vmem:[%s1 + $0x8] sm:$0xff] %v195
  %212 = vst [vmem:[%s1 + $0x10] sm:$0xff] %v196
  %213 = vst [vmem:[%s1 + $0x18] sm:$0xff] %v197
  %214 = vst [vmem:[%s1 + $0x20] sm:$0xff] %v198
  %215 = vst [vmem:[%s1 + $0x28] sm:$0xff] %v199
  %216 = vst [vmem:[%s1 + $0x30] sm:$0xff] %v200
  %217 = vst [vmem:[%s1 + $0x38] sm:$0xff] %v201
  %218 = vst [vmem:[%s1 + $0x40] sm:$0xff] %v202
  %219 = vst [vmem:[%s1 + $0x48] sm:$0xff] %v203
  %220 = vst [vmem:[%s1 + $0x50] sm:$0xff] %v204
  %221 = vst [vmem:[%s1 + $0x58] sm:$0xff] %v205
  %222 = vst [vmem:[%s1 + $0x60] sm:$0xff] %v206
  %223 = vst [vmem:[%s1 + $0x68] sm:$0xff] %v207
  %224 = vst [vmem:[%s1 + $0x70] sm:$0xff] %v208
  %225 = vst [vmem:[%s1 + $0x78] sm:$0xff] %v209
  %v226 = vld [vmem:[%s2] sm:$0xff]
  %v227 = vadd.f32 %v31, 0.0
  %v228 = vadd.f32 %v226, %v227
  %229 = vst [vmem:[%s2] sm:$0xff] %v228
  // Predicated region
  $region10: #{batch_norm_knn.2} parent=0 // pred_check
    _
  $region11: #{batch_norm_knn.2} parent=0 // pred_check_branch
    %231 = sbr.rel (0) target = $region13
  $region12: #{batch_norm_knn.2} parent=0 // pred_region
    _
  $region13: #{batch_norm_knn.2} parent=0 // pred_fallthru
    _
  // Predicated region
  $region14: #{batch_norm_knn.2} parent=0 // pred_check
    _
  $region15: #{batch_norm_knn.2} parent=0 // pred_check_branch
    %233 = sbr.rel (0) target = $region17
  $region16: #{batch_norm_knn.2} parent=0 // pred_region
    _
  $region17: #{batch_norm_knn.2} parent=0 // pred_fallthru
    _
  // Predicated region
  $region18: #{batch_norm_knn.2} parent=0 // pred_check
    _
  $region19: #{batch_norm_knn.2} parent=0 // pred_check_branch
    %235 = sbr.rel (0) target = $region21
  $region20: #{batch_norm_knn.2} parent=0 // pred_region
    _
  $region21: #{batch_norm_knn.2} parent=0 // pred_fallthru
    _
  // Predicated region
  $region22: #{batch_norm_knn.2} parent=0 // pred_check
    _
  $region23: #{batch_norm_knn.2} parent=0 // pred_check_branch
    %237 = sbr.rel (0) target = $region25
  $region24: #{batch_norm_knn.2} parent=0 // pred_region
    _
  $region25: #{batch_norm_knn.2} parent=0 // pred_fallthru
    _

// kernel: batch_norm_knn.3
$region0: #{batch_norm_knn.3}
  #allocation0 [shape = 'u32[]', space=smem, size = 0x4, offset = 0x4, fixed_abs, tag = 'smem constant byte address 0x4 - core index']
  #allocation1 [shape = 'u32[72,128]{1,0:T(1,128)}', space=vmem, size = 0x9000, scoped, tag = 'internal scratch']
  %s0 = inlined_call_operand.vmem [shape: f32[8,128], index: 0, kind: input, shape index: {}]
  %s1 = inlined_call_operand.vmem [shape: f32[128,256], index: 1, kind: input, shape index: {}]
  %s2 = inlined_call_operand.vmem [shape: f32[1,256], index: 2, kind: input, shape index: {}]
  %s3 = inlined_call_operand.vmem [shape: f32[8,256], index: 3, kind: output, shape index: {}]
  %s4 = sld [smem:[#allocation0]]
  $region22: #{batch_norm_knn.3} parent=0
    _
  %s6 = ssub.s32 1, %s4
  %s7 = scalar_select 0, %s6, %s4
  // Predicated region
  $region2: #{batch_norm_knn.3} parent=0 // pred_check
    _
  $region3: #{batch_norm_knn.3} parent=0 // pred_check_branch
    %9 = sbr.rel (0) target = $region5
  $region4: #{batch_norm_knn.3} parent=0 // pred_region
    _
  $region5: #{batch_norm_knn.3} parent=0 // pred_fallthru
    _
  // Predicated region
  $region6: #{batch_norm_knn.3} parent=0 // pred_check
    _
  $region7: #{batch_norm_knn.3} parent=0 // pred_check_branch
    %11 = sbr.rel (0) target = $region9
  $region8: #{batch_norm_knn.3} parent=0 // pred_region
    _
  $region9: #{batch_norm_knn.3} parent=0 // pred_fallthru
    _
  // Predicated region
  $region10: #{batch_norm_knn.3} parent=0 // pred_check
    _
  $region11: #{batch_norm_knn.3} parent=0 // pred_check_branch
    %13 = sbr.rel (0) target = $region13
  $region12: #{batch_norm_knn.3} parent=0 // pred_region
    _
  $region13: #{batch_norm_knn.3} parent=0 // pred_fallthru
    _
  %v14 = vld [vmem:[%s0] sm:$0xff]
  %v15 = vld [vmem:[%s1] sm:$0xff]
  %v16 = vld [vmem:[%s1 + $0x8] sm:$0xff]
  %v17 = vld [vmem:[%s1 + $0x10] sm:$0xff]
  %v18 = vld [vmem:[%s1 + $0x18] sm:$0xff]
  %v19 = vld [vmem:[%s1 + $0x20] sm:$0xff]
  %v20 = vld [vmem:[%s1 + $0x28] sm:$0xff]
  %v21 = vld [vmem:[%s1 + $0x30] sm:$0xff]
  %v22 = vld [vmem:[%s1 + $0x38] sm:$0xff]
  %v23 = vld [vmem:[%s1 + $0x40] sm:$0xff]
  %v24 = vld [vmem:[%s1 + $0x48] sm:$0xff]
  %v25 = vld [vmem:[%s1 + $0x50] sm:$0xff]
  %v26 = vld [vmem:[%s1 + $0x58] sm:$0xff]
  %v27 = vld [vmem:[%s1 + $0x60] sm:$0xff]
  %v28 = vld [vmem:[%s1 + $0x68] sm:$0xff]
  %v29 = vld [vmem:[%s1 + $0x70] sm:$0xff]
  %v30 = vld [vmem:[%s1 + $0x78] sm:$0xff]
  %v31 = vld [vmem:[%s1 + $0x80] sm:$0xff]
  %v32 = vld [vmem:[%s1 + $0x88] sm:$0xff]
  %v33 = vld [vmem:[%s1 + $0x90] sm:$0xff]
  %v34 = vld [vmem:[%s1 + $0x98] sm:$0xff]
  %v35 = vld [vmem:[%s1 + $0xa0] sm:$0xff]
  %v36 = vld [vmem:[%s1 + $0xa8] sm:$0xff]
  %v37 = vld [vmem:[%s1 + $0xb0] sm:$0xff]
  %v38 = vld [vmem:[%s1 + $0xb8] sm:$0xff]
  %v39 = vld [vmem:[%s1 + $0xc0] sm:$0xff]
  %v40 = vld [vmem:[%s1 + $0xc8] sm:$0xff]
  %v41 = vld [vmem:[%s1 + $0xd0] sm:$0xff]
  %v42 = vld [vmem:[%s1 + $0xd8] sm:$0xff]
  %v43 = vld [vmem:[%s1 + $0xe0] sm:$0xff]
  %v44 = vld [vmem:[%s1 + $0xe8] sm:$0xff]
  %v45 = vld [vmem:[%s1 + $0xf0] sm:$0xff]
  %v46 = vld [vmem:[%s1 + $0xf8] sm:$0xff]
  %v47 = vld [vmem:[%s2] sm:$0x3]
  %v49 = vperm.slane %v47, 0
  %v50 = vperm.slane %v47, 1
  %53 = vmatpush.msra.mxu0 %v45
  %54 = vmatpush.msra.mxu0 %v43
  %55 = vmatpush.msra.mxu0 %v41
  %56 = vmatpush.msra.mxu0 %v39
  %57 = vmatpush.msra.mxu0 %v37
  %58 = vmatpush.msra.mxu0 %v35
  %59 = vmatpush.msra.mxu0 %v33
  %60 = vmatpush.msra.mxu0 %v31
  %61 = vmatpush.msra.mxu0 %v29
  %62 = vmatpush.msra.mxu0 %v27
  %63 = vmatpush.msra.mxu0 %v25
  %64 = vmatpush.msra.mxu0 %v23
  %65 = vmatpush.msra.mxu0 %v21
  %66 = vmatpush.msra.mxu0 %v19
  %67 = vmatpush.msra.mxu0 %v17
  %68 = vmatpush.msra.mxu0 %v15
  %69 = vmatmul.f32.gmra.mxu0 %v14
  %v70 = vpop.f32.mrf.mxu0
  %v71 = vadd.f32 %v49, %v70
  %72 = vdwg.mxu0
  %73 = vmatpush.msra.mxu0 %v46
  %74 = vmatpush.msra.mxu0 %v44
  %75 = vmatpush.msra.mxu0 %v42
  %76 = vmatpush.msra.mxu0 %v40
  %77 = vmatpush.msra.mxu0 %v38
  %78 = vmatpush.msra.mxu0 %v36
  %79 = vmatpush.msra.mxu0 %v34
  %80 = vmatpush.msra.mxu0 %v32
  %81 = vmatpush.msra.mxu0 %v30
  %82 = vmatpush.msra.mxu0 %v28
  %83 = vmatpush.msra.mxu0 %v26
  %84 = vmatpush.msra.mxu0 %v24
  %85 = vmatpush.msra.mxu0 %v22
  %86 = vmatpush.msra.mxu0 %v20
  %87 = vmatpush.msra.mxu0 %v18
  %88 = vmatpush.msra.mxu0 %v16
  %89 = vmatmul.f32.gmra.mxu0 %v14
  %v90 = vpop.f32.mrf.mxu0
  %v91 = vadd.f32 %v50, %v90
  %92 = vdwg.mxu0
  %93 = vst [vmem:[%s3] sm:$0xff] %v71
  %94 = vst [vmem:[%s3 + $0x8] sm:$0xff] %v91
  // Predicated region
  $region14: #{batch_norm_knn.3} parent=0 // pred_check
    _
  $region15: #{batch_norm_knn.3} parent=0 // pred_check_branch
    %96 = sbr.rel (0) target = $region17
  $region16: #{batch_norm_knn.3} parent=0 // pred_region
    _
  $region17: #{batch_norm_knn.3} parent=0 // pred_fallthru
    _
  // Predicated region
  $region18: #{batch_norm_knn.3} parent=0 // pred_check
    _
  $region19: #{batch_norm_knn.3} parent=0 // pred_check_branch
    %98 = sbr.rel (0) target = $region21
  $region20: #{batch_norm_knn.3} parent=0 // pred_region
    _
  $region21: #{batch_norm_knn.3} parent=0 // pred_fallthru
    _

</llo_original>
